<compile_context>
chip_gen: v5e
topology: v5e:2x2
jax: 0.10.0
libtpu: 0.0.40
codegen_flags: <defaults>
</compile_context>

<pallas_src>
import functools
import numpy as np

import jax
import jax.numpy as jnp
from jax import lax
from jax.experimental import pallas as pl
from jax.experimental.pallas import tpu as pltpu


_NEG = -1e30  # max-pool boundary fill (PyTorch pads with -inf)


def _round_up(x, m):
    return ((x + m - 1) // m) * m


def _vmem_limit_bytes():
    """Generation-aware scoped-VMEM limit (leave headroom on v7x's 64 MiB)."""
    cap = 64 * 1024 * 1024
    try:
        info = pltpu.get_tpu_info()
        c = getattr(info, "vmem_capacity_bytes", None)
        if c:
            cap = int(c)
    except Exception:
        pass
    head = 16 * 1024 * 1024
    return int(min(max(cap - head, 32 * 1024 * 1024), 100 * 1024 * 1024))


def _pick_tile_h(h, w, force=None):
    """Pick an H tile (multiple of 32, divisor of H) or None for untiled."""
    if force is not None:
        if force < h and force % 32 == 0 and h % force == 0:
            return force
        return None
    per_row = 80 * w  # ~5 f32 planes double-buffered + pool temps + int8 out
    budget = 20 * 1024 * 1024
    if h * per_row <= budget or h % 32 != 0:
        return None
    target = max(32, (budget // per_row) // 32 * 32)
    best = None
    th = 32
    while th <= min(h - 1, target):
        if h % th == 0:
            best = th
        th += 32
    return best


# -----------------------------------------------------------------------------
# Region kernels: overlap logic + EdgeExtract, packed into one int8 bit-plane.
#   bit 0: pre_region  (p_fegc >= 0.5 & argmax(p_pre) == 0)
#   bit 1: edge_region (EdgeExtract(gt) truncated-to-int != 0)
#   bit 2: gt != 0
# -----------------------------------------------------------------------------
def _region_pack(fegc, a0, a1, a2, g, up_row, down_row):
    H, W = g.shape
    jj = lax.broadcasted_iota(jnp.int32, (1, W), 1)
    ii = lax.broadcasted_iota(jnp.int32, (H, 1), 0)

    # p_overlap[:, 3] = (one_hot_fegc == 1) & (argmax(p_pre) == 0)
    pre_bit = ((fegc >= 0.5) & (a0 >= a1) & (a0 >= a2)).astype(jnp.int32)

    # Separable 3x3 max pool via lane/sublane rolls (XLU) with boundary masks.
    left = jnp.where(jj == 0, _NEG, pltpu.roll(g, 1, axis=1))
    right = jnp.where(jj == W - 1, _NEG, pltpu.roll(g, W - 1, axis=1))
    hmax = jnp.maximum(g, jnp.maximum(left, right))
    up = jnp.where(ii == 0, up_row, pltpu.roll(hmax, 1, axis=0))
    down = jnp.where(ii == H - 1, down_row, pltpu.roll(hmax, H - 1, axis=0))
    pooled = jnp.maximum(hmax, jnp.maximum(up, down))

    # .long() truncation followed by .bool()  ->  int(|g - pooled|) != 0
    edge_bit = (jnp.abs(g - pooled).astype(jnp.int32) != 0).astype(jnp.int32)
    gt_bit = (g != 0.0).astype(jnp.int32)
    return (pre_bit + 2 * edge_bit + 4 * gt_bit).astype(jnp.int8)


def _region_kernel_full(fegc_ref, pre_ref, gt_ref, out_ref):
    fegc = fegc_ref[...][0, 0]
    pre = pre_ref[...]
    g = gt_ref[...][0, 0].astype(jnp.float32)
    H, W = g.shape
    packed = _region_pack(fegc, pre[0, 0], pre[0, 1], pre[0, 2], g, _NEG, _NEG)
    out_ref[...] = packed.reshape(1, H, W)


def _region_kernel_tiled(fegc_ref, pre_ref, gt_ref, gprev_ref, gnext_ref, out_ref):
    hi = pl.program_id(1)
    n_h = pl.num_programs(1)
    fegc = fegc_ref[...][0, 0]
    pre = pre_ref[...]
    g = gt_ref[...][0, 0].astype(jnp.float32)
    TH, W = g.shape

    jj = lax.broadcasted_iota(jnp.int32, (1, W), 1)

    def hpool(row):  # horizontal 3-max of a (1, W) row
        l = jnp.where(jj == 0, _NEG, pltpu.roll(row, 1, axis=1))
        r = jnp.where(jj == W - 1, _NEG, pltpu.roll(row, W - 1, axis=1))
        return jnp.maximum(row, jnp.maximum(l, r))

    # 1-row halos taken from 8-row aligned neighbor blocks (last / first row).
    prow = hpool(gprev_ref[...][0, 0, 7:8, :].astype(jnp.float32))
    nrow = hpool(gnext_ref[...][0, 0, 0:1, :].astype(jnp.float32))
    up_row = jnp.where(jnp.broadcast_to(hi == 0, prow.shape), _NEG, prow)
    down_row = jnp.where(jnp.broadcast_to(hi == n_h - 1, nrow.shape), _NEG, nrow)

    packed = _region_pack(fegc, pre[0, 0], pre[0, 1], pre[0, 2], g, up_row, down_row)
    out_ref[...] = packed.reshape(1, TH, W)


# -----------------------------------------------------------------------------
# Loss kernel: tiled Linear(4,256) + rsqrt row-norm (1/sqrt(tau) folded in)
#              + bf16 cosine tile + masked contrastive LAM loss accumulation.
# -----------------------------------------------------------------------------
def _lam_loss_kernel(meta_ref, pi_ref, pj_ref, w_ref, b_ref, o_ref,
                     sum_ref, cnt_ref, *, m, tau):
    i = pl.program_id(0)
    j = pl.program_id(1)

    @pl.when((i == 0) & (j == 0))
    def _():
        sum_ref[...] = jnp.zeros_like(sum_ref)
        cnt_ref[...] = jnp.zeros_like(cnt_ref)

    n_pos = meta_ref[0]     # runtime SMEM scalars -> compile-once across calls
    n_valid = meta_ref[1]
    inv_sqrt_tau = float(1.0 / np.sqrt(tau))

    def embed(p):
        f = jnp.dot(p, w_ref[...], preferred_element_type=jnp.float32) + b_ref[...]
        sq = jnp.sum(f * f, axis=-1, keepdims=True)
        # fold 1/sqrt(tau) into the row norm so the MXU tile is already cos/tau
        return (f * (lax.rsqrt(jnp.maximum(sq, 1e-16)) * inv_sqrt_tau)).astype(jnp.bfloat16)

    xi = embed(pi_ref[...])                                    # (TI, 256) bf16
    xj = embed(pj_ref[...])                                    # (TJ, 256) bf16
    s = lax.dot_general(xi, xj, (((1,), (1,)), ((), ())),
                        preferred_element_type=jnp.float32)    # cos/tau, (TI, TJ)
    TI, TJ = s.shape

    row = i * TI + lax.broadcasted_iota(jnp.int32, (TI, 1), 0)
    col = j * TJ + lax.broadcasted_iota(jnp.int32, (1, TJ), 1)
    same_group = (row < n_pos) == (col < n_pos)                # pos_neg_label
    hinge = jnp.maximum(m - s, 0.0)
    loss = jnp.where(same_group, hinge * hinge, s * s)
    valid = (row != col) & (row < n_valid) & (col < n_valid)   # mask_self + padding
    loss = jnp.where(valid, loss, 0.0)

    sum_ref[...] += jnp.sum(loss, keepdims=True)
    cnt_ref[...] += jnp.sum((loss != 0.0).astype(jnp.float32), keepdims=True)
    # guard count == 0 (original torch would produce NaN in that degenerate case)
    o_ref[...] = sum_ref[...] / jnp.maximum(cnt_ref[...], 1.0)


# -----------------------------------------------------------------------------
# LAMLoss module (host glue + Pallas kernels)
# -----------------------------------------------------------------------------
class LAMLoss:
    def __init__(self, in_channel=4, out_channel=256, num=1500, pos_num=128,
                 neg_num=256, m=0.5, tau=0.1, key=jax.random.PRNGKey(42)):
        self.in_channel = in_channel
        self.out_channel = out_channel
        self.num = num
        self.pos_num = pos_num
        self.neg_num = neg_num
        self.m = float(m)
        self.tau = float(tau)
        # deterministic nn.Linear-style init: U(-1/sqrt(fan_in), 1/sqrt(fan_in))
        kw, kb = jax.random.split(key)
        bound = 1.0 / np.sqrt(in_channel)
        self.w = jax.random.uniform(kw, (in_channel, out_channel), jnp.float32,
                                    -bound, bound)
        self.b = jax.random.uniform(kb, (1, out_channel), jnp.float32,
                                    -bound, bound)
        self._region_cache = {}
        self._loss_cache = {}
        # fixed-shape on-device gather of selected point features (compile-once)
        self._gather = jax.jit(lambda d1, ib, ih, iw: d1[ib, :, ih, iw])

    def _fixed_rows(self, b):
        # 128-aligned rows: unmasked MXU tiles / lane-dense stores on the MxM matrix
        return max(128, _round_up((self.pos_num + self.neg_num) * b, 128))

    # --- region kernel builder ----------------------------------------------
    def _region_call(self, b, h, w, force_tile_h=None):
        key = (b, h, w, force_tile_h)
        if key in self._region_cache:
            return self._region_cache[key]
        vmem_limit = _vmem_limit_bytes()
        th = _pick_tile_h(h, w, force_tile_h)
        if th is None:
            call = pl.pallas_call(
                _region_kernel_full,
                grid=(b,),
                out_shape=jax.ShapeDtypeStruct((b, h, w), jnp.int8),
                in_specs=[
                    pl.BlockSpec((1, 1, h, w), lambda i: (i, 0, 0, 0)),
                    pl.BlockSpec((1, 3, h, w), lambda i: (i, 0, 0, 0)),
                    pl.BlockSpec((1, 1, h, w), lambda i: (i, 0, 0, 0)),
                ],
                out_specs=pl.BlockSpec((1, h, w), lambda i: (i, 0, 0)),
                compiler_params=pltpu.CompilerParams(
                    dimension_semantics=("parallel",),
                    vmem_limit_bytes=vmem_limit),
            )
            fn = jax.jit(call)
            wrapped = lambda fegc, pre, gt: fn(fegc, pre, gt)
        else:
            n_h = h // th
            hb = th // 8        # halo block index granularity (8 gt rows)
            nhb = h // 8
            call = pl.pallas_call(
                _region_kernel_tiled,
                grid=(b, n_h),
                out_shape=jax.ShapeDtypeStruct((b, h, w), jnp.int8),
                in_specs=[
                    pl.BlockSpec((1, 1, th, w), lambda bi, hi: (bi, 0, hi, 0)),
                    pl.BlockSpec((1, 3, th, w), lambda bi, hi: (bi, 0, hi, 0)),
                    pl.BlockSpec((1, 1, th, w), lambda bi, hi: (bi, 0, hi, 0)),
                    # previous tile's last gt row (row 7 of this 8-row block)
                    pl.BlockSpec((1, 1, 8, w),
                                 lambda bi, hi: (bi, 0, jnp.maximum(hi * hb - 1, 0), 0)),
                    # next tile's first gt row (row 0 of this 8-row block)
                    pl.BlockSpec((1, 1, 8, w),
                                 lambda bi, hi: (bi, 0, jnp.minimum((hi + 1) * hb, nhb - 1), 0)),
                ],
                out_specs=pl.BlockSpec((1, th, w), lambda bi, hi: (bi, hi, 0)),
                compiler_params=pltpu.CompilerParams(
                    dimension_semantics=("parallel", "parallel"),
                    vmem_limit_bytes=vmem_limit),
            )
            fn = jax.jit(call)
            wrapped = lambda fegc, pre, gt: fn(fegc, pre, gt, gt, gt)
        self._region_cache[key] = wrapped
        return wrapped

    # --- loss kernel builder -------------------------------------------------
    def _loss_call(self, rows):
        if rows in self._loss_cache:
            return self._loss_cache[rows]
        c, oc = self.in_channel, self.out_channel
        ti = 256 if rows % 256 == 0 else 128
        n_t = rows // ti
        kernel = functools.partial(_lam_loss_kernel, m=self.m, tau=self.tau)
        call = pl.pallas_call(
            kernel,
            out_shape=jax.ShapeDtypeStruct((1, 1), jnp.float32),
            grid_spec=pltpu.PrefetchScalarGridSpec(
                num_scalar_prefetch=1,
                grid=(n_t, n_t),
                in_specs=[
                    pl.BlockSpec((ti, c), lambda i, j, meta: (i, 0)),
                    pl.BlockSpec((ti, c), lambda i, j, meta: (j, 0)),
                    pl.BlockSpec((c, oc), lambda i, j, meta: (0, 0)),
                    pl.BlockSpec((1, oc), lambda i, j, meta: (0, 0)),
                ],
                out_specs=pl.BlockSpec((1, 1), lambda i, j, meta: (0, 0)),
                scratch_shapes=[pltpu.VMEM((1, 1), jnp.float32),
                                pltpu.VMEM((1, 1), jnp.float32)],
            ),
            compiler_params=pltpu.CompilerParams(
                dimension_semantics=("arbitrary", "arbitrary")),
        )
        fn = jax.jit(call)
        self._loss_cache[rows] = fn
        return fn

    # --- forward --------------------------------------------------------------
    def __call__(self, d1_fegc, p_fegc, p_pre, gt, *, seed=7):
        b, c, h, w = d1_fegc.shape
        d1 = jnp.asarray(d1_fegc, jnp.float32)

        packed_dev = self._region_call(b, h, w)(
            jnp.asarray(p_fegc, jnp.float32),
            jnp.asarray(p_pre, jnp.float32),
            jnp.asarray(gt, jnp.float32))

        # Single int8 D2H of the packed (pre | edge | gt) bit-planes.
        packed = np.asarray(packed_dev)
        pre_np = (packed & 1) != 0
        edge_np = (packed & 2) != 0
        gt_np = (packed & 4) != 0

        # TODO(synk): dynamic-shape point selection (nonzero / masked_select /
        # isin / randperm) is data dependent; kept as host-side numpy glue.  A
        # fully on-device fixed-capacity compaction would remove this sync.
        pbi, phi, pwi = np.nonzero(pre_np)
        if pbi.shape[0] < self.num * b:
            ebi, ehi, ewi = np.nonzero(edge_np)
            abi = np.concatenate([pbi, ebi])
            ahi = np.concatenate([phi, ehi])
            awi = np.concatenate([pwi, ewi])
        else:
            abi, ahi, awi = pbi, phi, pwi

        rows = self._fixed_rows(b)
        sel = np.zeros((rows,), np.int64)
        if abi.shape[0] > 0:
            pos_mask = gt_np[abi, ahi, awi]
            pos_ids = np.nonzero(pos_mask)[0]
            neg_ids = np.nonzero(~pos_mask)[0]
            rng = np.random.default_rng(seed)
            pos_ids = pos_ids[rng.permutation(pos_ids.shape[0])[: self.pos_num * b]]
            neg_ids = neg_ids[rng.permutation(neg_ids.shape[0])[: self.neg_num * b]]
            n_pos = int(pos_ids.shape[0])
            n_valid = n_pos + int(neg_ids.shape[0])
            sel[:n_pos] = pos_ids
            sel[n_pos:n_valid] = neg_ids
            idx_b = abi[sel].astype(np.int32)
            idx_h = ahi[sel].astype(np.int32)
            idx_w = awi[sel].astype(np.int32)
        else:
            n_pos, n_valid = 0, 0
            idx_b = np.zeros((rows,), np.int32)
            idx_h = np.zeros((rows,), np.int32)
            idx_w = np.zeros((rows,), np.int32)

        # Fixed-shape on-device gather: d1_fegc never leaves HBM, only the tiny
        # index slab crosses host->device (padding rows are masked via n_valid).
        pts = self._gather(d1, jnp.asarray(idx_b), jnp.asarray(idx_h),
                           jnp.asarray(idx_w))

        meta = jnp.asarray(np.array([n_pos, n_valid], np.int32))
        out = self._loss_call(rows)(meta, pts, pts, self.w, self.b)
        return out[0, 0]


# -----------------------------------------------------------------------------
# Pure numpy references (used only for in-script validation).
# -----------------------------------------------------------------------------
def _region_ref_np(p_fegc, p_pre, gt):
    fegc = np.asarray(p_fegc)[:, 0]
    a = np.asarray(p_pre)
    g = np.asarray(gt)[:, 0].astype(np.float32)
    pre = (fegc >= 0.5) & (a[:, 0] >= a[:, 1]) & (a[:, 0] >= a[:, 2])
    bsz, h, w = g.shape
    gp = np.full((bsz, h + 2, w + 2), -np.inf, np.float32)
    gp[:, 1:-1, 1:-1] = g
    pooled = np.full_like(g, -np.inf)
    for di in range(3):
        for dj in range(3):
            pooled = np.maximum(pooled, gp[:, di:di + h, dj:dj + w])
    edge = np.abs(g - pooled).astype(np.int64) != 0
    return pre, edge, g != 0


def _loss_ref_np(pts, n_pos, n_valid, w, bias, m, tau):
    f = pts[:n_valid] @ w + bias
    nrm = np.sqrt(np.maximum(np.sum(f * f, axis=1, keepdims=True), 1e-16))
    xn = f / nrm
    s = (xn @ xn.T) / tau
    same = np.arange(n_valid) < n_pos
    same_group = same[:, None] == same[None, :]
    loss = np.where(same_group, np.maximum(m - s, 0.0) ** 2, s ** 2)
    np.fill_diagonal(loss, 0.0)
    total = loss.sum()
    cnt = (loss != 0).sum()
    return total / max(cnt, 1)


# -----------------------------------------------------------------------------
if __name__ == "__main__":
    key = jax.random.PRNGKey(0)
    k1, k2, k3, k4, k5, k6, k7 = jax.random.split(key, 7)

    # --- end-to-end LAMLoss at small shapes (untiled region path) ------------
    b, c, h, w = 2, 4, 16, 16
    d1_fegc = jax.random.uniform(k1, (b, c, h, w), jnp.float32)
    p_fegc = jax.random.uniform(k2, (b, 1, h, w), jnp.float32)
    p_pre = jax.random.uniform(k3, (b, 3, h, w), jnp.float32)
    gt = jnp.zeros((b, 1, h, w), jnp.float32).at[:, :, 4:12, 4:12].set(1.0)

    loss_mod = LAMLoss(in_channel=c)
    y = loss_mod(d1_fegc, p_fegc, p_pre, gt)
    jax.block_until_ready(y)
    assert np.isfinite(float(y))

    # region kernel (untiled path) vs numpy reference
    packed = np.asarray(loss_mod._region_call(b, h, w)(p_fegc, p_pre, gt))
    pre_r, edge_r, gt_r = _region_ref_np(p_fegc, p_pre, gt)
    assert np.array_equal((packed & 1) != 0, pre_r)
    assert np.array_equal((packed & 2) != 0, edge_r)
    assert np.array_equal((packed & 4) != 0, gt_r)

    # region kernel (H-tiled path with halo) vs numpy reference
    b2, h2, w2 = 1, 64, 128
    pf2 = jax.random.uniform(k4, (b2, 1, h2, w2), jnp.float32)
    pp2 = jax.random.uniform(k5, (b2, 3, h2, w2), jnp.float32)
    gt2 = (jax.random.uniform(k6, (b2, 1, h2, w2)) > 0.5).astype(jnp.float32)
    packed2 = np.asarray(
        loss_mod._region_call(b2, h2, w2, force_tile_h=32)(pf2, pp2, gt2))
    pre2, edge2, g2 = _region_ref_np(pf2, pp2, gt2)
    assert np.array_equal((packed2 & 1) != 0, pre2)
    assert np.array_equal((packed2 & 2) != 0, edge2)
    assert np.array_equal((packed2 & 4) != 0, g2)

    # tiled loss kernel vs numpy reference (same compiled call as end-to-end)
    rows = loss_mod._fixed_rows(b)                      # 768 -> 3x3 grid of 256
    pts_t = jax.random.uniform(k7, (rows, c), jnp.float32)
    n_pos_t, n_valid_t = 200, 700
    meta_t = jnp.asarray(np.array([n_pos_t, n_valid_t], np.int32))
    out_t = loss_mod._loss_call(rows)(meta_t, pts_t, pts_t, loss_mod.w, loss_mod.b)
    jax.block_until_ready(out_t)
    ref_t = _loss_ref_np(np.asarray(pts_t), n_pos_t, n_valid_t,
                         np.asarray(loss_mod.w), np.asarray(loss_mod.b),
                         loss_mod.m, loss_mod.tau)
    assert np.isfinite(float(out_t[0, 0]))
    np.testing.assert_allclose(float(out_t[0, 0]), ref_t, rtol=0.08)

    print("KERNEL_OK")
</pallas_src>

<mosaic_0001>
module attributes {stable_mosaic.version = 11 : i64} {
  func.func @_region_kernel_full(%arg0: i32, %arg1: memref<1x1x16x16xf32, #tpu.memory_space<vmem>>, %arg2: memref<1x3x16x16xf32, #tpu.memory_space<vmem>>, %arg3: memref<1x1x16x16xf32, #tpu.memory_space<vmem>>, %arg4: memref<1x16x16xi8, #tpu.memory_space<vmem>>) attributes {dimension_semantics = [#tpu.dimension_semantics<parallel>], iteration_bounds = array<i64: 2>, scalar_prefetch = 0 : i64, scratch_operands = 0 : i64, tpu.core_type = #tpu.core_type<tc>, window_params = [{transform_indices = @transform_0, window_bounds = array<i64: 1, 1, 16, 16>}, {transform_indices = @transform_1, window_bounds = array<i64: 1, 3, 16, 16>}, {transform_indices = @transform_2, window_bounds = array<i64: 1, 1, 16, 16>}, {transform_indices = @transform_3, window_bounds = array<i64: 1, 16, 16>}]} {
    %c0 = arith.constant 0 : index
    %c0_0 = arith.constant 0 : index
    %c0_1 = arith.constant 0 : index
    %c0_2 = arith.constant 0 : index
    %0 = vector.load %arg1[%c0, %c0_0, %c0_1, %c0_2] : memref<1x1x16x16xf32, #tpu.memory_space<vmem>>, vector<1x1x16x16xf32>
    %1 = vector.shape_cast %0 : vector<1x1x16x16xf32> to vector<16x16xf32>
    %c0_3 = arith.constant 0 : index
    %c0_4 = arith.constant 0 : index
    %c0_5 = arith.constant 0 : index
    %c0_6 = arith.constant 0 : index
    %2 = vector.load %arg2[%c0_3, %c0_4, %c0_5, %c0_6] : memref<1x3x16x16xf32, #tpu.memory_space<vmem>>, vector<1x3x16x16xf32>
    %c0_7 = arith.constant 0 : index
    %c0_8 = arith.constant 0 : index
    %c0_9 = arith.constant 0 : index
    %c0_10 = arith.constant 0 : index
    %3 = vector.load %arg3[%c0_7, %c0_8, %c0_9, %c0_10] : memref<1x1x16x16xf32, #tpu.memory_space<vmem>>, vector<1x1x16x16xf32>
    %4 = vector.shape_cast %3 : vector<1x1x16x16xf32> to vector<16x16xf32>
    %5 = vector.extract_strided_slice %2 {offsets = [0, 0, 0, 0], sizes = [1, 1, 16, 16], strides = [1, 1, 1, 1]} : vector<1x3x16x16xf32> to vector<1x1x16x16xf32>
    %6 = vector.shape_cast %5 : vector<1x1x16x16xf32> to vector<16x16xf32>
    %7 = vector.extract_strided_slice %2 {offsets = [0, 1, 0, 0], sizes = [1, 1, 16, 16], strides = [1, 1, 1, 1]} : vector<1x3x16x16xf32> to vector<1x1x16x16xf32>
    %8 = vector.shape_cast %7 : vector<1x1x16x16xf32> to vector<16x16xf32>
    %9 = vector.extract_strided_slice %2 {offsets = [0, 2, 0, 0], sizes = [1, 1, 16, 16], strides = [1, 1, 1, 1]} : vector<1x3x16x16xf32> to vector<1x1x16x16xf32>
    %10 = vector.shape_cast %9 : vector<1x1x16x16xf32> to vector<16x16xf32>
    %11 = tpu.iota {dimensions = array<i32: 1>} : vector<1x16xi32>
    %12 = tpu.iota {dimensions = array<i32: 0>} : vector<16x1xi32>
    %cst = arith.constant 5.000000e-01 : f32
    %13 = vector.broadcast %cst : f32 to vector<16x16xf32>
    %14 = arith.cmpf oge, %1, %13 : vector<16x16xf32>
    %15 = arith.cmpf oge, %6, %8 : vector<16x16xf32>
    %16 = arith.andi %14, %15 : vector<16x16xi1>
    %17 = arith.cmpf oge, %6, %10 : vector<16x16xf32>
    %18 = arith.andi %16, %17 : vector<16x16xi1>
    %19 = arith.extui %18 : vector<16x16xi1> to vector<16x16xi32>
    %c0_i32 = arith.constant 0 : i32
    %20 = vector.broadcast %c0_i32 : i32 to vector<1x16xi32>
    %21 = arith.cmpi eq, %11, %20 : vector<1x16xi32>
    %c1_i32 = arith.constant 1 : i32
    %22 = tpu.dynamic_rotate %4 by %c1_i32 dim 1 : vector<16x16xf32>, i32 -> vector<16x16xf32>
    %cst_11 = arith.constant -1.000000e+30 : f32
    %23 = vector.shape_cast %21 : vector<1x16xi1> to vector<1x16xi1>
    %24 = vector.broadcast %23 : vector<1x16xi1> to vector<16x16xi1>
    %25 = vector.broadcast %cst_11 : f32 to vector<16x16xf32>
    %26 = arith.select %24, %25, %22 : vector<16x16xi1>, vector<16x16xf32>
    %c15_i32 = arith.constant 15 : i32
    %27 = vector.broadcast %c15_i32 : i32 to vector<1x16xi32>
    %28 = arith.cmpi eq, %11, %27 : vector<1x16xi32>
    %c15_i32_12 = arith.constant 15 : i32
    %29 = tpu.dynamic_rotate %4 by %c15_i32_12 dim 1 : vector<16x16xf32>, i32 -> vector<16x16xf32>
    %cst_13 = arith.constant -1.000000e+30 : f32
    %30 = vector.shape_cast %28 : vector<1x16xi1> to vector<1x16xi1>
    %31 = vector.broadcast %30 : vector<1x16xi1> to vector<16x16xi1>
    %32 = vector.broadcast %cst_13 : f32 to vector<16x16xf32>
    %33 = arith.select %31, %32, %29 : vector<16x16xi1>, vector<16x16xf32>
    %34 = arith.maximumf %26, %33 : vector<16x16xf32>
    %35 = arith.maximumf %4, %34 : vector<16x16xf32>
    %c0_i32_14 = arith.constant 0 : i32
    %36 = vector.broadcast %c0_i32_14 : i32 to vector<16x1xi32>
    %37 = arith.cmpi eq, %12, %36 : vector<16x1xi32>
    %c1_i32_15 = arith.constant 1 : i32
    %38 = tpu.dynamic_rotate %35 by %c1_i32_15 dim 0 : vector<16x16xf32>, i32 -> vector<16x16xf32>
    %cst_16 = arith.constant -1.000000e+30 : f32
    %39 = vector.shape_cast %37 : vector<16x1xi1> to vector<16x1xi1>
    %40 = vector.broadcast %39 : vector<16x1xi1> to vector<16x16xi1>
    %41 = vector.broadcast %cst_16 : f32 to vector<16x16xf32>
    %42 = arith.select %40, %41, %38 : vector<16x16xi1>, vector<16x16xf32>
    %c15_i32_17 = arith.constant 15 : i32
    %43 = vector.broadcast %c15_i32_17 : i32 to vector<16x1xi32>
    %44 = arith.cmpi eq, %12, %43 : vector<16x1xi32>
    %c15_i32_18 = arith.constant 15 : i32
    %45 = tpu.dynamic_rotate %35 by %c15_i32_18 dim 0 : vector<16x16xf32>, i32 -> vector<16x16xf32>
    %cst_19 = arith.constant -1.000000e+30 : f32
    %46 = vector.shape_cast %44 : vector<16x1xi1> to vector<16x1xi1>
    %47 = vector.broadcast %46 : vector<16x1xi1> to vector<16x16xi1>
    %48 = vector.broadcast %cst_19 : f32 to vector<16x16xf32>
    %49 = arith.select %47, %48, %45 : vector<16x16xi1>, vector<16x16xf32>
    %50 = arith.maximumf %42, %49 : vector<16x16xf32>
    %51 = arith.maximumf %35, %50 : vector<16x16xf32>
    %52 = arith.subf %4, %51 : vector<16x16xf32>
    %53 = math.absf %52 : vector<16x16xf32>
    %54 = arith.fptosi %53 : vector<16x16xf32> to vector<16x16xi32>
    %c0_i32_20 = arith.constant 0 : i32
    %55 = vector.broadcast %c0_i32_20 : i32 to vector<16x16xi32>
    %56 = arith.cmpi ne, %54, %55 : vector<16x16xi32>
    %57 = arith.extui %56 : vector<16x16xi1> to vector<16x16xi32>
    %cst_21 = arith.constant 0.000000e+00 : f32
    %58 = vector.broadcast %cst_21 : f32 to vector<16x16xf32>
    %59 = arith.cmpf one, %4, %58 : vector<16x16xf32>
    %60 = arith.extui %59 : vector<16x16xi1> to vector<16x16xi32>
    %c2_i32 = arith.constant 2 : i32
    %61 = vector.broadcast %c2_i32 : i32 to vector<16x16xi32>
    %62 = arith.muli %61, %57 : vector<16x16xi32>
    %63 = arith.addi %19, %62 : vector<16x16xi32>
    %c4_i32 = arith.constant 4 : i32
    %64 = vector.broadcast %c4_i32 : i32 to vector<16x16xi32>
    %65 = arith.muli %64, %60 : vector<16x16xi32>
    %66 = arith.addi %63, %65 : vector<16x16xi32>
    %67 = arith.trunci %66 : vector<16x16xi32> to vector<16x16xi8>
    %68 = vector.shape_cast %67 : vector<16x16xi8> to vector<1x16x16xi8>
    %c0_22 = arith.constant 0 : index
    %c0_23 = arith.constant 0 : index
    %c0_24 = arith.constant 0 : index
    %69 = vector.load %arg4[%c0_22, %c0_23, %c0_24] : memref<1x16x16xi8, #tpu.memory_space<vmem>>, vector<1x16x16xi8>
    tpu.vector_store %arg4[%c0_22, %c0_23, %c0_24], %68 {strides = array<i32>} : memref<1x16x16xi8, #tpu.memory_space<vmem>>, vector<1x16x16xi8>,
    return
  }
  func.func @transform_0(%arg0: i32) -> (i32, i32, i32, i32) {
    %c0_i32 = arith.constant 0 : i32
    %c0_i32_0 = arith.constant 0 : i32
    %c0_i32_1 = arith.constant 0 : i32
    %c0_i32_2 = arith.constant 0 : i32
    return %arg0, %c0_i32, %c0_i32_0, %c0_i32_1 : i32, i32, i32, i32
  }
  func.func @transform_1(%arg0: i32) -> (i32, i32, i32, i32) {
    %c0_i32 = arith.constant 0 : i32
    %c0_i32_0 = arith.constant 0 : i32
    %c0_i32_1 = arith.constant 0 : i32
    %c0_i32_2 = arith.constant 0 : i32
    return %arg0, %c0_i32, %c0_i32_0, %c0_i32_1 : i32, i32, i32, i32
  }
  func.func @transform_2(%arg0: i32) -> (i32, i32, i32, i32) {
    %c0_i32 = arith.constant 0 : i32
    %c0_i32_0 = arith.constant 0 : i32
    %c0_i32_1 = arith.constant 0 : i32
    %c0_i32_2 = arith.constant 0 : i32
    return %arg0, %c0_i32, %c0_i32_0, %c0_i32_1 : i32, i32, i32, i32
  }
  func.func @transform_3(%arg0: i32) -> (i32, i32, i32) {
    %c0_i32 = arith.constant 0 : i32
    %c0_i32_0 = arith.constant 0 : i32
    %c0_i32_1 = arith.constant 0 : i32
    return %arg0, %c0_i32, %c0_i32_0 : i32, i32, i32
  }
}

</mosaic_0001>

<llo_original>
// kernel: tpu_custom_call.1
$region0: #{tpu_custom_call.1}
  #allocation0 [shape = 'u32[]', space=smem, size = 0x4, offset = 0x4, fixed_abs, tag = 'smem constant byte address 0x4 - core index']
  #allocation1 [shape = 'u32[72,128]{1,0:T(1,128)}', space=vmem, size = 0x9000, scoped, tag = 'internal scratch']
  %s0 = inlined_call_operand.hbm [shape: f32[2,1,16,16], index: 0, kind: input, shape index: {}]
  %s1 = inlined_call_operand.hbm [shape: f32[2,3,16,16], index: 1, kind: input, shape index: {}]
  %s2 = inlined_call_operand.hbm [shape: f32[2,1,16,16], index: 2, kind: input, shape index: {}]
  %s3 = inlined_call_operand.hbm [shape: s8[2,16,16], index: 3, kind: output, shape index: {}]
  %s4 = sld [smem:[#allocation0]]
  $region57: #{tpu_custom_call.1} parent=0
    _
  %s6 = ssub.s32 1, %s4
  %s7 = scalar_select 0, %s6, %s4
  $region1: #{tpu_custom_call.1} parent=0
    #allocation2 [shape = 'u8[16384]{0}', space=vmem, size = 0x4000, scoped, tag = 'input window, operand 0']
    #allocation3 [shape = 's32[2]{0}', space=sflag, size = 0x8, scoped, tag = 'scoped memory for tpu_custom_call.1']
    #allocation4 [shape = 's32[2]{0}', space=sflag, size = 0x8, scoped, tag = 'scoped memory for tpu_custom_call.1']
    #allocation5 [shape = 'u8[49152]{0}', space=vmem, size = 0xc000, scoped, tag = 'input window, operand 1']
    #allocation6 [shape = 's32[2]{0}', space=sflag, size = 0x8, scoped, tag = 'scoped memory for tpu_custom_call.1']
    #allocation7 [shape = 'u8[16384]{0}', space=vmem, size = 0x4000, scoped, tag = 'input window, operand 2']
    #allocation8 [shape = 'u8[4096]{0}', space=vmem, size = 0x1000, scoped, tag = 'output window, operand 0']
    %8 = vsyncpa [#allocation3], 0
    %s9 = scalar_lea.sflag [#allocation3], 1
    %10 = vsyncpa %s9, 0
    %11 = vsyncpa [#allocation6], 0
    %s12 = scalar_lea.sflag [#allocation6], 1
    %13 = vsyncpa %s12, 0
    %14 = vsyncpa [#allocation4], 0
    %s15 = scalar_lea.sflag [#allocation4], 1
    %16 = vsyncpa %s15, 0
    loop: start=0, step=1, limit=4
    $region2: #{tpu_custom_call.1} parent=1 // loop_pre_header
      _
    $region3: #{tpu_custom_call.1} parent=1 // loop_header
      %s18 = sphi 0, %s22
      %p19 = scmp.ge.s32.totalorder %s18, 4
      %s28 = sphi 0, %s30
      %s31 = sphi 0, %s28
      %s32 = sphi 0, %s31
      %s48 = sphi 0, %s32
      %s54 = sphi 0, %s56
      %s57 = sphi 0, %s54
      %s58 = sphi 0, %s57
      %s74 = sphi 0, %s58
      %s80 = sphi 0, %s82
      %s83 = sphi 0, %s80
      %s84 = sphi 0, %s83
      %s100 = sphi 0, %s84
      %s106 = sphi 0, %s108
      %s109 = sphi 0, %s106
      %s110 = sphi 0, %s109
      %s126 = sphi 0, %s110
    $region4: #{tpu_custom_call.1} parent=1 // loop_header_branch
      %21 = sbr.rel (%p19) target = $region8
    $region5: #{tpu_custom_call.1} parent=1 // loop_body
      %s23 = ssub.s32 %s18, 1
      %s24 = ssub.s32 %s18, 2
      %s25 = sadd.s32 %s18, 1
      %s26 = ssub.s32 %s18, %s25
      %p27 = scmp.eq.s32.totalorder %s26, 0
      %s29 = sadd.s32 %s28, 1
      %s30 = scalar_select %p27, %s28, %s29
      %p33 = pneg %p27
      %p34 = scmp.eq.s32.totalorder %s18, 1
      %p35 = por %p33, %p34
      %p36 = scmp.ne.s32.totalorder %s28, %s31
      %p37 = scmp.eq.s32.totalorder %s18, 0
      %p38 = por %p36, %p37
      %p39 = scmp.ne.s32.totalorder %s28, %s31
      %p40 = scmp.eq.s32.totalorder %s23, 1
      %p41 = por %p39, %p40
      %p42 = scmp.ne.s32.totalorder %s31, %s32
      %p43 = scmp.eq.s32.totalorder %s23, 0
      %p44 = por %p42, %p43
      %p45 = scmp.ne.s32.totalorder %s31, %s32
      %p46 = scmp.eq.s32.totalorder %s24, 1
      %p47 = por %p45, %p46
      %p49 = scmp.ne.s32.totalorder %s32, %s48
      %p50 = scmp.eq.s32.totalorder %s24, 0
      %p51 = por %p49, %p50
      %s52 = ssub.s32 %s18, %s25
      %p53 = scmp.eq.s32.totalorder %s52, 0
      %s55 = sadd.s32 %s54, 1
      %s56 = scalar_select %p53, %s54, %s55
      %p59 = pneg %p53
      %p60 = scmp.eq.s32.totalorder %s18, 1
      %p61 = por %p59, %p60
      %p62 = scmp.ne.s32.totalorder %s54, %s57
      %p63 = scmp.eq.s32.totalorder %s18, 0
      %p64 = por %p62, %p63
      %p65 = scmp.ne.s32.totalorder %s54, %s57
      %p66 = scmp.eq.s32.totalorder %s23, 1
      %p67 = por %p65, %p66
      %p68 = scmp.ne.s32.totalorder %s57, %s58
      %p69 = scmp.eq.s32.totalorder %s23, 0
      %p70 = por %p68, %p69
      %p71 = scmp.ne.s32.totalorder %s57, %s58
      %p72 = scmp.eq.s32.totalorder %s24, 1
      %p73 = por %p71, %p72
      %p75 = scmp.ne.s32.totalorder %s58, %s74
      %p76 = scmp.eq.s32.totalorder %s24, 0
      %p77 = por %p75, %p76
      %s78 = ssub.s32 %s18, %s25
      %p79 = scmp.eq.s32.totalorder %s78, 0
      %s81 = sadd.s32 %s80, 1
      %s82 = scalar_select %p79, %s80, %s81
      %p85 = pneg %p79
      %p86 = scmp.eq.s32.totalorder %s18, 1
      %p87 = por %p85, %p86
      %p88 = scmp.ne.s32.totalorder %s80, %s83
      %p89 = scmp.eq.s32.totalorder %s18, 0
      %p90 = por %p88, %p89
      %p91 = scmp.ne.s32.totalorder %s80, %s83
      %p92 = scmp.eq.s32.totalorder %s23, 1
      %p93 = por %p91, %p92
      %p94 = scmp.ne.s32.totalorder %s83, %s84
      %p95 = scmp.eq.s32.totalorder %s23, 0
      %p96 = por %p94, %p95
      %p97 = scmp.ne.s32.totalorder %s83, %s84
      %p98 = scmp.eq.s32.totalorder %s24, 1
      %p99 = por %p97, %p98
      %p101 = scmp.ne.s32.totalorder %s84, %s100
      %p102 = scmp.eq.s32.totalorder %s24, 0
      %p103 = por %p101, %p102
      %s104 = ssub.s32 %s18, %s25
      %p105 = scmp.eq.s32.totalorder %s104, 0
      %s107 = sadd.s32 %s106, 1
      %s108 = scalar_select %p105, %s106, %s107
      %p111 = pneg %p105
      %p112 = scmp.eq.s32.totalorder %s18, 1
      %p113 = por %p111, %p112
      %p114 = scmp.ne.s32.totalorder %s106, %s109
      %p115 = scmp.eq.s32.totalorder %s18, 0
      %p116 = por %p114, %p115
      %p117 = scmp.ne.s32.totalorder %s106, %s109
      %p118 = scmp.eq.s32.totalorder %s23, 1
      %p119 = por %p117, %p118
      %p120 = scmp.ne.s32.totalorder %s109, %s110
      %p121 = scmp.eq.s32.totalorder %s23, 0
      %p122 = por %p120, %p121
      %p123 = scmp.ne.s32.totalorder %s109, %s110
      %p124 = scmp.eq.s32.totalorder %s24, 1
      %p125 = por %p123, %p124
      %p127 = scmp.ne.s32.totalorder %s110, %s126
      %p128 = scmp.eq.s32.totalorder %s24, 0
      %p129 = por %p127, %p128
      %p130 = scmp.le.s32.totalorder 1, %s18
      %p131 = scmp.lt.s32.totalorder %s18, 3
      %p132 = pnand %p130, %p131
      %p133 = pneg %p132
      // Predicated region
      $region9: #{tpu_custom_call.1} parent=5 // pred_check
        _
      $region10: #{tpu_custom_call.1} parent=5 // pred_check_branch
        %135 = sbr.rel (%p132) target = $region12
      $region11: #{tpu_custom_call.1} parent=5 // pred_region
        %s136 = ssub.s32 %s18, 1
      $region12: #{tpu_custom_call.1} parent=5 // pred_fallthru
        _
      %p137 = scmp.lt.s32.totalorder %s18, 2
      // Predicated region
      $region13: #{tpu_custom_call.1} parent=5 // pred_check
        %p138 = pneg %p137
      $region14: #{tpu_custom_call.1} parent=5 // pred_check_branch
        %140 = sbr.rel (%p138) target = $region16
      $region15: #{tpu_custom_call.1} parent=5 // pred_region
        // Predicated region
        $region17: #{tpu_custom_call.1} parent=15 // pred_check
          %p141 = pneg %p38
        $region18: #{tpu_custom_call.1} parent=15 // pred_check_branch
          %143 = sbr.rel (%p141) target = $region20
        $region19: #{tpu_custom_call.1} parent=15 // pred_region
          %s144 = sand.u32 %s28, 1
          %s145 = scalar_lea.sflag [#allocation3], %s144
          %s146 = sand.u32 %s28, 1
          %s147 = smul.addr %s146, 16
          %s148 = scalar_lea.vmem [#allocation2], %s147
          %150 = vsyncadd %s145, 0
          %s151 = smul.addr %s18, 2
          %s152 = smul.addr %s151, 8
          %s153 = scalar_lea.hbm %s0, %s152
          %s154 = sshll.u32 %s153, 4
          %s155 = int_to_ptr.hbm [resolvable:$true] %s154
          %s156 = sshll.u32 %s148, 4
          %s157 = int_to_ptr.vmem [resolvable:$true] %s156
          %162 = dma.hbm_to_vmem [thread:$0]  %s155, 256, %s157, %s145, 128, 128, 8
        $region20: #{tpu_custom_call.1} parent=15 // pred_fallthru
          _
        // Predicated region
        $region21: #{tpu_custom_call.1} parent=15 // pred_check
          %p163 = pneg %p64
        $region22: #{tpu_custom_call.1} parent=15 // pred_check_branch
          %165 = sbr.rel (%p163) target = $region24
        $region23: #{tpu_custom_call.1} parent=15 // pred_region
          %s166 = sand.u32 %s18, 1
          %s167 = scalar_lea.sflag [#allocation6], %s166
          %s168 = sand.u32 %s54, 1
          %s169 = smul.addr %s168, 48
          %s170 = scalar_lea.vmem [#allocation5], %s169
          %172 = vsyncadd %s167, 0
          %s173 = smul.addr %s18, 6
          %s174 = smul.addr %s173, 8
          %s175 = scalar_lea.hbm %s1, %s174
          %s176 = sshll.u32 %s175, 4
          %s177 = int_to_ptr.hbm [resolvable:$true] %s176
          %s178 = sshll.u32 %s170, 4
          %s179 = int_to_ptr.vmem [resolvable:$true] %s178
          %184 = dma.hbm_to_vmem [thread:$0]  %s177, 768, %s179, %s167, 128, 128, 8
        $region24: #{tpu_custom_call.1} parent=15 // pred_fallthru
          _
        // Predicated region
        $region25: #{tpu_custom_call.1} parent=15 // pred_check
          %p185 = pneg %p90
        $region26: #{tpu_custom_call.1} parent=15 // pred_check_branch
          %187 = sbr.rel (%p185) target = $region28
        $region27: #{tpu_custom_call.1} parent=15 // pred_region
          %s188 = sand.u32 %s18, 1
          %s189 = scalar_lea.sflag [#allocation6], %s188
          %s190 = sand.u32 %s80, 1
          %s191 = smul.addr %s190, 16
          %s192 = scalar_lea.vmem [#allocation7], %s191
          %194 = vsyncadd %s189, 0
          %s195 = smul.addr %s18, 2
          %s196 = smul.addr %s195, 8
          %s197 = scalar_lea.hbm %s2, %s196
          %s198 = sshll.u32 %s197, 4
          %s199 = int_to_ptr.hbm [resolvable:$true] %s198
          %s200 = sshll.u32 %s192, 4
          %s201 = int_to_ptr.vmem [resolvable:$true] %s200
          %206 = dma.hbm_to_vmem [thread:$0]  %s199, 256, %s201, %s189, 128, 128, 8
        $region28: #{tpu_custom_call.1} parent=15 // pred_fallthru
          _
      $region16: #{tpu_custom_call.1} parent=5 // pred_fallthru
        _
      %p207 = scmp.le.s32.totalorder 1, %s18
      %p208 = scmp.lt.s32.totalorder %s18, 3
      %p209 = pnand %p207, %p208
      %p210 = pneg %p209
      // Predicated region
      $region29: #{tpu_custom_call.1} parent=5 // pred_check
        _
      $region30: #{tpu_custom_call.1} parent=5 // pred_check_branch
        %212 = sbr.rel (%p209) target = $region32
      $region31: #{tpu_custom_call.1} parent=5 // pred_region
        %s213 = ssub.s32 %s18, 1
        %s214 = sand.u32 %s31, 1
        %s215 = scalar_lea.sflag [#allocation3], %s214
        %s216 = sand.u32 %s31, 1
        %s217 = smul.addr %s216, 16
        %s218 = scalar_lea.vmem [#allocation2], %s217
        // Predicated region
        $region33: #{tpu_custom_call.1} parent=31 // pred_check
          %p219 = pneg %p44
        $region34: #{tpu_custom_call.1} parent=31 // pred_check_branch
          %221 = sbr.rel (%p219) target = $region36
        $region35: #{tpu_custom_call.1} parent=31 // pred_region
          %223 = dma.done %s215, 256
        $region36: #{tpu_custom_call.1} parent=31 // pred_fallthru
          _
        %s224 = sand.u32 %s23, 1
        %s225 = scalar_lea.sflag [#allocation6], %s224
        %s226 = sand.u32 %s57, 1
        %s227 = smul.addr %s226, 48
        %s228 = scalar_lea.vmem [#allocation5], %s227
        // Predicated region
        $region37: #{tpu_custom_call.1} parent=31 // pred_check
          %p229 = pneg %p70
        $region38: #{tpu_custom_call.1} parent=31 // pred_check_branch
          %231 = sbr.rel (%p229) target = $region40
        $region39: #{tpu_custom_call.1} parent=31 // pred_region
          %233 = dma.done %s225, 768
        $region40: #{tpu_custom_call.1} parent=31 // pred_fallthru
          _
        %s234 = sand.u32 %s23, 1
        %s235 = scalar_lea.sflag [#allocation6], %s234
        %s236 = sand.u32 %s83, 1
        %s237 = smul.addr %s236, 16
        %s238 = scalar_lea.vmem [#allocation7], %s237
        // Predicated region
        $region41: #{tpu_custom_call.1} parent=31 // pred_check
          %p239 = pneg %p96
        $region42: #{tpu_custom_call.1} parent=31 // pred_check_branch
          %241 = sbr.rel (%p239) target = $region44
        $region43: #{tpu_custom_call.1} parent=31 // pred_region
          %243 = dma.done %s235, 256
        $region44: #{tpu_custom_call.1} parent=31 // pred_fallthru
          _
        %s244 = sand.u32 %s31, 1
        %s245 = scalar_lea.sflag [#allocation3], %s244
        %s246 = sand.u32 %s31, 1
        %s247 = smul.addr %s246, 16
        %s248 = scalar_lea.vmem [#allocation2], %s247
        %p249 = pneg %p44
        %p250 = pneg %p41
        %s251 = sand.u32 %s23, 1
        %s252 = scalar_lea.sflag [#allocation6], %s251
        %s253 = sand.u32 %s57, 1
        %s254 = smul.addr %s253, 48
        %s255 = scalar_lea.vmem [#allocation5], %s254
        %p256 = pneg %p70
        %p257 = pneg %p67
        %s258 = sand.u32 %s23, 1
        %s259 = scalar_lea.sflag [#allocation6], %s258
        %s260 = sand.u32 %s83, 1
        %s261 = smul.addr %s260, 16
        %s262 = scalar_lea.vmem [#allocation7], %s261
        %p263 = pneg %p96
        %p264 = pneg %p93
        %p265 = pneg %p122
        %p266 = pneg %p119
        %s267 = sand.u32 %s109, 1
        %s268 = scalar_lea.sflag [#allocation4], %s267
        %s269 = sand.u32 %s109, 1
        %s270 = smul.addr %s269, 4
        %s271 = scalar_lea.vmem [#allocation8], %s270
        %v272 = vld [vmem:[%s218] sm:$0xff]
        %v273 = vld [vmem:[%s218 + $0x8] sm:$0xff]
        %v274 = vld [vmem:[%s228] sm:$0xff]
        %v275 = vld [vmem:[%s228 + $0x8] sm:$0xff]
        %v276 = vld [vmem:[%s228 + $0x10] sm:$0xff]
        %v277 = vld [vmem:[%s228 + $0x18] sm:$0xff]
        %v278 = vld [vmem:[%s228 + $0x20] sm:$0xff]
        %v279 = vld [vmem:[%s228 + $0x28] sm:$0xff]
        %v280 = vld [vmem:[%s238] sm:$0xff]
        %v281 = vld [vmem:[%s238 + $0x8] sm:$0xff]
        %v282 = vlaneseq
        %v283 = vand.u32 %v282, 127
        %v284 = vlaneseq
        %v285 = vshrl.u32 %v284, 7
        %v286 = vadd.s32 %v285, 8
        %vm287 = vcmp.ge.f32.partialorder %v272, 0.5
        %vm288 = vcmp.ge.f32.partialorder %v273, 0.5
        %vm289 = vcmp.ge.f32.partialorder %v274, %v276
        %vm290 = vcmp.ge.f32.partialorder %v275, %v277
        %vm291 = vmand %vm287, %vm289
        %vm292 = vmand %vm288, %vm290
        %vm293 = vcmp.ge.f32.partialorder %v274, %v278
        %vm294 = vcmp.ge.f32.partialorder %v275, %v279
        %vm295 = vmand %vm291, %vm293
        %vm296 = vmand %vm292, %vm294
        %v297 = vsel %vm295, 1, 0
        %v298 = vsel %vm296, 1, 0
        %vm299 = vcmp.eq.s32.totalorder %v283, 0
        %vm300 = vcmask 1047680
        %301 = vrot.lane.b32.xlu0 %v280, 16
        %v302 = vpop.permute.xlu0 %301
        %v303 = vsel %vm300, %v302, %v280
        %304 = vrot.lane.b32.xlu0 %v281, 16
        %v305 = vpop.permute.xlu0 %304
        %v306 = vsel %vm300, %v305, %v281
        %307 = vrot.lane.b32.xlu0 %v303, 16
        %v308 = vpop.permute.xlu0 %307
        %309 = vrot.lane.b32.xlu0 %v306, 16
        %v310 = vpop.permute.xlu0 %309
        %v311 = vsel %vm300, %v308, %v280
        %v312 = vsel %vm300, %v310, %v281
        %v313 = vsel %vm299, 1, 0
        %vm314 = vcmp.eq.s32.totalorder %v313, 1
        %317 = vrot.lane.b32.xlu0 %v311, 113
        %v318 = vpop.permute.xlu0 %317
        %319 = vrot.lane.b32.xlu0 %v312, 113
        %v320 = vpop.permute.xlu0 %319
        %v323 = vsel %vm314, -1e+30, %v318
        %v324 = vsel %vm314, -1e+30, %v320
        %vm325 = vcmp.eq.s32.totalorder %v283, 15
        %v326 = vsel %vm325, 1, 0
        %vm327 = vcmp.eq.s32.totalorder %v326, 1
        %328 = vrot.lane.b32.xlu0 %v311, 127
        %v329 = vpop.permute.xlu0 %328
        %330 = vrot.lane.b32.xlu0 %v312, 127
        %v331 = vpop.permute.xlu0 %330
        %v334 = vsel %vm327, -1e+30, %v329
        %v335 = vsel %vm327, -1e+30, %v331
        %v336 = vmax.f32 %v323, %v334
        %v337 = vmax.f32 %v324, %v335
        %v338 = vmax.f32 %v280, %v336
        %v339 = vmax.f32 %v281, %v337
        %vm340 = vcmp.eq.s32.totalorder %v285, 0
        %vm341 = vcmp.eq.s32.totalorder %v286, 0
        %v342 = vrot.slane %v338, 7
        %v343 = vrot.slane %v339, 7
        %vm344 = vcmp.lt.s32.totalorder %v285, 1
        %v345 = vsel %vm344, %v342, %v343
        %v346 = vsel %vm344, %v343, %v342
        %v347 = vsel %vm340, 1, 0
        %v348 = vsel %vm341, 1, 0
        %vm349 = vcmp.eq.s32.totalorder %v347, 1
        %vm350 = vcmp.eq.s32.totalorder %v348, 1
        %v351 = vsel %vm349, -1e+30, %v346
        %v352 = vsel %vm350, -1e+30, %v345
        %vm353 = vcmp.eq.s32.totalorder %v285, 15
        %vm354 = vcmp.eq.s32.totalorder %v286, 15
        %v355 = vrot.slane %v338, 1
        %v356 = vrot.slane %v339, 1
        %vm357 = vcmp.lt.s32.totalorder %v285, 7
        %v358 = vsel %vm357, %v355, %v356
        %v359 = vsel %vm357, %v356, %v355
        %v360 = vsel %vm353, 1, 0
        %v361 = vsel %vm354, 1, 0
        %vm362 = vcmp.eq.s32.totalorder %v360, 1
        %vm363 = vcmp.eq.s32.totalorder %v361, 1
        %v364 = vsel %vm362, -1e+30, %v358
        %v365 = vsel %vm363, -1e+30, %v359
        %v366 = vmax.f32 %v351, %v364
        %v367 = vmax.f32 %v352, %v365
        %v368 = vmax.f32 %v338, %v366
        %v369 = vmax.f32 %v339, %v367
        %v370 = vsub.f32 %v280, %v368
        %v371 = vsub.f32 %v281, %v369
        %v372 = vand.u32 2147483647, %v370
        %v373 = vand.u32 2147483647, %v371
        %v374 = vcvt.f32.s32.to.zero.pseudo %v372
        %v375 = vcvt.f32.s32.to.zero.pseudo %v373
        %vm376 = vcmp.ne.s32.totalorder %v374, 0
        %vm377 = vcmp.ne.s32.totalorder %v375, 0
        %v378 = vsel %vm376, 1, 0
        %v379 = vsel %vm377, 1, 0
        %vm380 = vcmp.ne.f32.partialorder %v280, 0.0
        %vm381 = vcmp.ne.f32.partialorder %v281, 0.0
        %v382 = vsel %vm380, 1, 0
        %v383 = vsel %vm381, 1, 0
        %v384 = vmul.u32 %v378, 2
        %v385 = vmul.u32 %v379, 2
        %v386 = vadd.s32 %v297, %v384
        %v387 = vadd.s32 %v298, %v385
        %v388 = vmul.u32 %v382, 4
        %v389 = vmul.u32 %v383, 4
        %v390 = vadd.s32 %v386, %v388
        %v391 = vadd.s32 %v387, %v389
        %v392 = vpack.c.b16 %v390, %v390
        %v393 = vpack.c.b8 %v392, %v392
        %v394 = vpack.c.b16 %v391, %v391
        %v395 = vpack.c.b8 %v394, %v394
        %vm396 = vcmask 123904
        %397 = vst.msk [vmem:[%s271] sm:$0x3] %vm396, %v393
        %398 = vst.msk [vmem:[%s271 + $0x2] sm:$0x3] %vm396, %v395
        %s399 = sand.u32 %s109, 1
        %s400 = scalar_lea.sflag [#allocation4], %s399
        %s401 = sand.u32 %s109, 1
        %s402 = smul.addr %s401, 4
        %s403 = scalar_lea.vmem [#allocation8], %s402
        // Predicated region
        $region45: #{tpu_custom_call.1} parent=31 // pred_check
          %p404 = pneg %p119
        $region46: #{tpu_custom_call.1} parent=31 // pred_check_branch
          %406 = sbr.rel (%p404) target = $region48
        $region47: #{tpu_custom_call.1} parent=31 // pred_region
          %408 = vsyncadd %s400, 0
          %s409 = smul.addr %s23, 2
          %s410 = smul.addr %s409, 2
          %s411 = scalar_lea.hbm %s3, %s410
          %s412 = sshll.u32 %s403, 4
          %s413 = int_to_ptr.vmem [resolvable:$true] %s412
          %s414 = sshll.u32 %s411, 4
          %s415 = int_to_ptr.hbm [resolvable:$true] %s414
          %420 = dma.vmem_to_hbm [thread:$0]  %s413, 64, %s415, %s400, 32, 32, 2
        $region48: #{tpu_custom_call.1} parent=31 // pred_fallthru
          _
      $region32: #{tpu_custom_call.1} parent=5 // pred_fallthru
        _
      %p421 = scmp.le.s32.totalorder 2, %s18
      // Predicated region
      $region49: #{tpu_custom_call.1} parent=5 // pred_check
        %p422 = pneg %p421
      $region50: #{tpu_custom_call.1} parent=5 // pred_check_branch
        %424 = sbr.rel (%p422) target = $region52
      $region51: #{tpu_custom_call.1} parent=5 // pred_region
        %s425 = ssub.s32 %s18, 2
        // Predicated region
        $region53: #{tpu_custom_call.1} parent=51 // pred_check
          %p426 = pneg %p125
        $region54: #{tpu_custom_call.1} parent=51 // pred_check_branch
          %428 = sbr.rel (%p426) target = $region56
        $region55: #{tpu_custom_call.1} parent=51 // pred_region
          %s429 = sand.u32 %s110, 1
          %s430 = scalar_lea.sflag [#allocation4], %s429
          %s431 = sand.u32 %s110, 1
          %s432 = smul.addr %s431, 4
          %s433 = scalar_lea.vmem [#allocation8], %s432
          %435 = dma.done %s430, 64
        $region56: #{tpu_custom_call.1} parent=51 // pred_fallthru
          _
      $region52: #{tpu_custom_call.1} parent=5 // pred_fallthru
        _
    $region6: #{tpu_custom_call.1} parent=1 // loop_footer
      %s22 = sadd.s32 1, %s18
    $region7: #{tpu_custom_call.1} parent=1 // loop_footer_branch
      %17 = sbr.rel target = $region3
    $region8: #{tpu_custom_call.1} parent=1 // loop_exit
      _
    %436 = vsyncpa [#allocation3], 1
    %s437 = scalar_lea.sflag [#allocation3], 1
    %438 = vsyncpa %s437, 1
    %439 = vsyncpa [#allocation6], 1
    %s440 = scalar_lea.sflag [#allocation6], 1
    %441 = vsyncpa %s440, 1
    %442 = vsyncpa [#allocation4], 1
    %s443 = scalar_lea.sflag [#allocation4], 1
    %444 = vsyncpa %s443, 1

</llo_original>
